<compile_context>
chip_gen: v7x
topology: tpu7x:2x2x1
jax: 0.10.0
libtpu: 0.0.40
codegen_flags: <defaults>
</compile_context>

<pallas_src>
import functools

import jax
import jax.numpy as jnp
from jax.experimental import pallas as pl
from jax.experimental.pallas import tpu as pltpu

# ---- model dims (from the PyTorch module) -----------------------------------
F_IN, H1, H2, F_OUT = 5, 4, 4, 3
SUB = 8  # sublanes folded with batch elements

# ---- packed-parameter layout (one SMEM slab, PyTorch (out,in) weight order) --
W1_OFF = 0
B1_OFF = W1_OFF + H1 * F_IN          # 20
W2_OFF = B1_OFF + H1                 # 24
B2_OFF = W2_OFF + H2 * H1            # 40
W3_OFF = B2_OFF + H2                 # 44
B3_OFF = W3_OFF + F_OUT * H2         # 56
P_LEN = B3_OFF + F_OUT               # 59
P_PAD = 64


def _sigmoid(z):
    # Overflow-safe logistic on the EUP: sigmoid(z) == 0.5*tanh(z/2) + 0.5
    return 0.5 * jnp.tanh(0.5 * z) + 0.5


def mlp_kernel(p_ref, x_ref, o_ref):
    """Batch-on-lanes + batch-on-sublanes MLP forward.

    p_ref : SMEM f32[P_PAD]            packed {W1,b1,W2,b2,W3,b3}
    x_ref : VMEM f32[F_IN*8,  Tc]      feature k lives in sublane slab
                                       [k*8:(k+1)*8, :]; batch fills
                                       (sublane, lane) -> full vregs.
    o_ref : VMEM f32[F_OUT*8, Tc]      softmax probabilities, same folding.
    """
    # Input feature slabs as full (8, Tc) vreg-dense blocks (static slices).
    rows = [x_ref[k * SUB:(k + 1) * SUB, :] for k in range(F_IN)]

    def linear(in_rows, w_off, b_off, n_out, n_in):
        # y_j = b_j + sum_k W[j,k] * in_k  -- VPU scalar*vector FMAs with the
        # weight scalars read straight from SMEM (no MXU involvement).
        out = []
        for j in range(n_out):
            acc = in_rows[0] * p_ref[w_off + j * n_in]
            for k in range(1, n_in):
                acc = acc + in_rows[k] * p_ref[w_off + j * n_in + k]
            out.append(acc + p_ref[b_off + j])
        return out

    h1 = [_sigmoid(z) for z in linear(rows, W1_OFF, B1_OFF, H1, F_IN)]
    h2 = [_sigmoid(z) for z in linear(h1, W2_OFF, B2_OFF, H2, H1)]
    z3 = linear(h2, W3_OFF, B3_OFF, F_OUT, H2)

    # Softmax over the class axis: classes live on separate sublane slabs, so
    # max/sum reductions are elementwise across F_OUT slabs (no XLU reduce).
    m = z3[0]
    for j in range(1, F_OUT):
        m = jnp.maximum(m, z3[j])
    e = [jnp.exp(z - m) for z in z3]
    s = e[0]
    for j in range(1, F_OUT):
        s = s + e[j]
    # EUP approx reciprocal + one Newton-Raphson step (rel err ~1e-7).
    inv = pl.reciprocal(s, approx=True)
    inv = inv * (2.0 - s * inv)
    for j in range(F_OUT):
        o_ref[j * SUB:(j + 1) * SUB, :] = e[j] * inv


def _round_up(n, m):
    return ((n + m - 1) // m) * m


def pack_params(w1, b1, w2, b2, w3, b3):
    """Pack PyTorch-layout params ((out,in) weights, (out,) biases) into one slab."""
    flat = jnp.concatenate([
        w1.reshape(-1), b1.reshape(-1),
        w2.reshape(-1), b2.reshape(-1),
        w3.reshape(-1), b3.reshape(-1),
    ]).astype(jnp.float32)
    return jnp.pad(flat, (0, P_PAD - P_LEN))


@functools.partial(jax.jit, static_argnames=("tile_b",))
def pallas_mlp(x, w1, b1, w2, b2, w3, b3, tile_b=131072):
    """x: (B, 5) f32; weights in PyTorch layout (out_features, in_features)."""
    B = x.shape[0]
    packed = pack_params(w1, b1, w2, b2, w3, b3)

    # Batch folded onto both sublane (8) and lane (128) axes -> pad B to a
    # multiple of 1024.  Tile the batch so block DMA double-buffers behind
    # compute; params stay SMEM-resident across the whole grid.
    tb = _round_up(min(tile_b, _round_up(B, SUB * 128)), SUB * 128)
    b_pad = _round_up(B, tb)
    tc = tb // SUB                      # lane columns per tile
    cols = b_pad // SUB                 # total lane columns

    xT = x.T.astype(jnp.float32)                       # (F_IN, B)
    if b_pad != B:
        xT = jnp.pad(xT, ((0, 0), (0, b_pad - B)))     # (F_IN, b_pad)
    # Fold: batch index b -> (sublane r, lane c) = (b // cols, b % cols).
    x_folded = xT.reshape(F_IN * SUB, cols)

    out_folded = pl.pallas_call(
        mlp_kernel,
        out_shape=jax.ShapeDtypeStruct((F_OUT * SUB, cols), jnp.float32),
        grid=(b_pad // tb,),
        in_specs=[
            pl.BlockSpec(memory_space=pltpu.MemorySpace.SMEM),   # packed params
            pl.BlockSpec((F_IN * SUB, tc), lambda i: (0, i)),    # x batch tile
        ],
        out_specs=pl.BlockSpec((F_OUT * SUB, tc), lambda i: (0, i)),
        compiler_params=pltpu.CompilerParams(
            dimension_semantics=("parallel",),      # megacore split on v7x
            vmem_limit_bytes=32 * 1024 * 1024,      # covers v5e's 16 MiB default
        ),
    )(packed, x_folded)

    # Unfold back to (B, F_OUT) using the same b = r*cols + c mapping.
    out = out_folded.reshape(F_OUT, b_pad)[:, :B].T
    return out


def init_params(key):
    # Deterministic init mimicking nn.Linear's U(-1/sqrt(fan_in), 1/sqrt(fan_in)),
    # stored in PyTorch layout: W is (out_features, in_features), b is (out,).
    ks = jax.random.split(key, 6)

    def lin(kw, kb, fan_in, fan_out):
        bound = 1.0 / jnp.sqrt(float(fan_in))
        w = jax.random.uniform(kw, (fan_out, fan_in), jnp.float32, -bound, bound)
        b = jax.random.uniform(kb, (fan_out,), jnp.float32, -bound, bound)
        return w, b

    w1, b1 = lin(ks[0], ks[1], F_IN, H1)
    w2, b2 = lin(ks[2], ks[3], H1, H2)
    w3, b3 = lin(ks[4], ks[5], H2, F_OUT)
    return w1, b1, w2, b2, w3, b3


def reference_mlp(x, w1, b1, w2, b2, w3, b3):
    h1 = jax.nn.sigmoid(x @ w1.T + b1)
    h2 = jax.nn.sigmoid(h1 @ w2.T + b2)
    return jax.nn.softmax(h2 @ w3.T + b3, axis=1)


if __name__ == "__main__":
    key = jax.random.PRNGKey(0)
    k_x, k_p = jax.random.split(key)

    batch = 8
    x = jax.random.normal(k_x, (batch, F_IN), dtype=jnp.float32)
    params = init_params(k_p)

    out = jax.block_until_ready(pallas_mlp(x, *params))
    ref = reference_mlp(x, *params)

    assert out.shape == (batch, F_OUT)
    assert jnp.allclose(out, ref, atol=1e-5, rtol=1e-5)
    assert jnp.allclose(jnp.sum(out, axis=1), 1.0, atol=1e-5)

    print("KERNEL_OK")
</pallas_src>

<mosaic_0001>
module attributes {stable_mosaic.version = 11 : i64} {
  func.func @mlp_kernel(%arg0: i32, %arg1: memref<64xf32, #tpu.memory_space<smem>>, %arg2: memref<40x128xf32, #tpu.memory_space<vmem>>, %arg3: memref<24x128xf32, #tpu.memory_space<vmem>>) attributes {dimension_semantics = [#tpu.dimension_semantics<parallel>], iteration_bounds = array<i64: 1>, scalar_prefetch = 0 : i64, scratch_operands = 0 : i64, tpu.core_type = #tpu.core_type<tc>, window_params = [{transform_indices = @transform_0, window_bounds = array<i64: 64>}, {transform_indices = @transform_1, window_bounds = array<i64: 40, 128>}, {transform_indices = @transform_2, window_bounds = array<i64: 24, 128>}]} {
    %c0 = arith.constant 0 : index
    %c0_0 = arith.constant 0 : index
    %0 = vector.load %arg2[%c0, %c0_0] : memref<40x128xf32, #tpu.memory_space<vmem>>, vector<8x128xf32>
    %c8 = arith.constant 8 : index
    %c0_1 = arith.constant 0 : index
    %1 = vector.load %arg2[%c8, %c0_1] : memref<40x128xf32, #tpu.memory_space<vmem>>, vector<8x128xf32>
    %c16 = arith.constant 16 : index
    %c0_2 = arith.constant 0 : index
    %2 = vector.load %arg2[%c16, %c0_2] : memref<40x128xf32, #tpu.memory_space<vmem>>, vector<8x128xf32>
    %c24 = arith.constant 24 : index
    %c0_3 = arith.constant 0 : index
    %3 = vector.load %arg2[%c24, %c0_3] : memref<40x128xf32, #tpu.memory_space<vmem>>, vector<8x128xf32>
    %c32 = arith.constant 32 : index
    %c0_4 = arith.constant 0 : index
    %4 = vector.load %arg2[%c32, %c0_4] : memref<40x128xf32, #tpu.memory_space<vmem>>, vector<8x128xf32>
    %c0_5 = arith.constant 0 : index
    %5 = memref.load %arg1[%c0_5] : memref<64xf32, #tpu.memory_space<smem>>
    %6 = vector.broadcast %5 : f32 to vector<8x128xf32>
    %7 = arith.mulf %0, %6 : vector<8x128xf32>
    %c1 = arith.constant 1 : index
    %8 = memref.load %arg1[%c1] : memref<64xf32, #tpu.memory_space<smem>>
    %9 = vector.broadcast %8 : f32 to vector<8x128xf32>
    %10 = arith.mulf %1, %9 : vector<8x128xf32>
    %11 = arith.addf %7, %10 : vector<8x128xf32>
    %c2 = arith.constant 2 : index
    %12 = memref.load %arg1[%c2] : memref<64xf32, #tpu.memory_space<smem>>
    %13 = vector.broadcast %12 : f32 to vector<8x128xf32>
    %14 = arith.mulf %2, %13 : vector<8x128xf32>
    %15 = arith.addf %11, %14 : vector<8x128xf32>
    %c3 = arith.constant 3 : index
    %16 = memref.load %arg1[%c3] : memref<64xf32, #tpu.memory_space<smem>>
    %17 = vector.broadcast %16 : f32 to vector<8x128xf32>
    %18 = arith.mulf %3, %17 : vector<8x128xf32>
    %19 = arith.addf %15, %18 : vector<8x128xf32>
    %c4 = arith.constant 4 : index
    %20 = memref.load %arg1[%c4] : memref<64xf32, #tpu.memory_space<smem>>
    %21 = vector.broadcast %20 : f32 to vector<8x128xf32>
    %22 = arith.mulf %4, %21 : vector<8x128xf32>
    %23 = arith.addf %19, %22 : vector<8x128xf32>
    %c20 = arith.constant 20 : index
    %24 = memref.load %arg1[%c20] : memref<64xf32, #tpu.memory_space<smem>>
    %25 = vector.broadcast %24 : f32 to vector<8x128xf32>
    %26 = arith.addf %23, %25 : vector<8x128xf32>
    %c5 = arith.constant 5 : index
    %27 = memref.load %arg1[%c5] : memref<64xf32, #tpu.memory_space<smem>>
    %28 = vector.broadcast %27 : f32 to vector<8x128xf32>
    %29 = arith.mulf %0, %28 : vector<8x128xf32>
    %c6 = arith.constant 6 : index
    %30 = memref.load %arg1[%c6] : memref<64xf32, #tpu.memory_space<smem>>
    %31 = vector.broadcast %30 : f32 to vector<8x128xf32>
    %32 = arith.mulf %1, %31 : vector<8x128xf32>
    %33 = arith.addf %29, %32 : vector<8x128xf32>
    %c7 = arith.constant 7 : index
    %34 = memref.load %arg1[%c7] : memref<64xf32, #tpu.memory_space<smem>>
    %35 = vector.broadcast %34 : f32 to vector<8x128xf32>
    %36 = arith.mulf %2, %35 : vector<8x128xf32>
    %37 = arith.addf %33, %36 : vector<8x128xf32>
    %c8_6 = arith.constant 8 : index
    %38 = memref.load %arg1[%c8_6] : memref<64xf32, #tpu.memory_space<smem>>
    %39 = vector.broadcast %38 : f32 to vector<8x128xf32>
    %40 = arith.mulf %3, %39 : vector<8x128xf32>
    %41 = arith.addf %37, %40 : vector<8x128xf32>
    %c9 = arith.constant 9 : index
    %42 = memref.load %arg1[%c9] : memref<64xf32, #tpu.memory_space<smem>>
    %43 = vector.broadcast %42 : f32 to vector<8x128xf32>
    %44 = arith.mulf %4, %43 : vector<8x128xf32>
    %45 = arith.addf %41, %44 : vector<8x128xf32>
    %c21 = arith.constant 21 : index
    %46 = memref.load %arg1[%c21] : memref<64xf32, #tpu.memory_space<smem>>
    %47 = vector.broadcast %46 : f32 to vector<8x128xf32>
    %48 = arith.addf %45, %47 : vector<8x128xf32>
    %c10 = arith.constant 10 : index
    %49 = memref.load %arg1[%c10] : memref<64xf32, #tpu.memory_space<smem>>
    %50 = vector.broadcast %49 : f32 to vector<8x128xf32>
    %51 = arith.mulf %0, %50 : vector<8x128xf32>
    %c11 = arith.constant 11 : index
    %52 = memref.load %arg1[%c11] : memref<64xf32, #tpu.memory_space<smem>>
    %53 = vector.broadcast %52 : f32 to vector<8x128xf32>
    %54 = arith.mulf %1, %53 : vector<8x128xf32>
    %55 = arith.addf %51, %54 : vector<8x128xf32>
    %c12 = arith.constant 12 : index
    %56 = memref.load %arg1[%c12] : memref<64xf32, #tpu.memory_space<smem>>
    %57 = vector.broadcast %56 : f32 to vector<8x128xf32>
    %58 = arith.mulf %2, %57 : vector<8x128xf32>
    %59 = arith.addf %55, %58 : vector<8x128xf32>
    %c13 = arith.constant 13 : index
    %60 = memref.load %arg1[%c13] : memref<64xf32, #tpu.memory_space<smem>>
    %61 = vector.broadcast %60 : f32 to vector<8x128xf32>
    %62 = arith.mulf %3, %61 : vector<8x128xf32>
    %63 = arith.addf %59, %62 : vector<8x128xf32>
    %c14 = arith.constant 14 : index
    %64 = memref.load %arg1[%c14] : memref<64xf32, #tpu.memory_space<smem>>
    %65 = vector.broadcast %64 : f32 to vector<8x128xf32>
    %66 = arith.mulf %4, %65 : vector<8x128xf32>
    %67 = arith.addf %63, %66 : vector<8x128xf32>
    %c22 = arith.constant 22 : index
    %68 = memref.load %arg1[%c22] : memref<64xf32, #tpu.memory_space<smem>>
    %69 = vector.broadcast %68 : f32 to vector<8x128xf32>
    %70 = arith.addf %67, %69 : vector<8x128xf32>
    %c15 = arith.constant 15 : index
    %71 = memref.load %arg1[%c15] : memref<64xf32, #tpu.memory_space<smem>>
    %72 = vector.broadcast %71 : f32 to vector<8x128xf32>
    %73 = arith.mulf %0, %72 : vector<8x128xf32>
    %c16_7 = arith.constant 16 : index
    %74 = memref.load %arg1[%c16_7] : memref<64xf32, #tpu.memory_space<smem>>
    %75 = vector.broadcast %74 : f32 to vector<8x128xf32>
    %76 = arith.mulf %1, %75 : vector<8x128xf32>
    %77 = arith.addf %73, %76 : vector<8x128xf32>
    %c17 = arith.constant 17 : index
    %78 = memref.load %arg1[%c17] : memref<64xf32, #tpu.memory_space<smem>>
    %79 = vector.broadcast %78 : f32 to vector<8x128xf32>
    %80 = arith.mulf %2, %79 : vector<8x128xf32>
    %81 = arith.addf %77, %80 : vector<8x128xf32>
    %c18 = arith.constant 18 : index
    %82 = memref.load %arg1[%c18] : memref<64xf32, #tpu.memory_space<smem>>
    %83 = vector.broadcast %82 : f32 to vector<8x128xf32>
    %84 = arith.mulf %3, %83 : vector<8x128xf32>
    %85 = arith.addf %81, %84 : vector<8x128xf32>
    %c19 = arith.constant 19 : index
    %86 = memref.load %arg1[%c19] : memref<64xf32, #tpu.memory_space<smem>>
    %87 = vector.broadcast %86 : f32 to vector<8x128xf32>
    %88 = arith.mulf %4, %87 : vector<8x128xf32>
    %89 = arith.addf %85, %88 : vector<8x128xf32>
    %c23 = arith.constant 23 : index
    %90 = memref.load %arg1[%c23] : memref<64xf32, #tpu.memory_space<smem>>
    %91 = vector.broadcast %90 : f32 to vector<8x128xf32>
    %92 = arith.addf %89, %91 : vector<8x128xf32>
    %cst = arith.constant 5.000000e-01 : f32
    %93 = vector.broadcast %cst : f32 to vector<8x128xf32>
    %94 = arith.mulf %93, %26 : vector<8x128xf32>
    %95 = math.tanh %94 : vector<8x128xf32>
    %cst_8 = arith.constant 5.000000e-01 : f32
    %96 = vector.broadcast %cst_8 : f32 to vector<8x128xf32>
    %97 = arith.mulf %96, %95 : vector<8x128xf32>
    %cst_9 = arith.constant 5.000000e-01 : f32
    %98 = vector.broadcast %cst_9 : f32 to vector<8x128xf32>
    %99 = arith.addf %97, %98 : vector<8x128xf32>
    %cst_10 = arith.constant 5.000000e-01 : f32
    %100 = vector.broadcast %cst_10 : f32 to vector<8x128xf32>
    %101 = arith.mulf %100, %48 : vector<8x128xf32>
    %102 = math.tanh %101 : vector<8x128xf32>
    %cst_11 = arith.constant 5.000000e-01 : f32
    %103 = vector.broadcast %cst_11 : f32 to vector<8x128xf32>
    %104 = arith.mulf %103, %102 : vector<8x128xf32>
    %cst_12 = arith.constant 5.000000e-01 : f32
    %105 = vector.broadcast %cst_12 : f32 to vector<8x128xf32>
    %106 = arith.addf %104, %105 : vector<8x128xf32>
    %cst_13 = arith.constant 5.000000e-01 : f32
    %107 = vector.broadcast %cst_13 : f32 to vector<8x128xf32>
    %108 = arith.mulf %107, %70 : vector<8x128xf32>
    %109 = math.tanh %108 : vector<8x128xf32>
    %cst_14 = arith.constant 5.000000e-01 : f32
    %110 = vector.broadcast %cst_14 : f32 to vector<8x128xf32>
    %111 = arith.mulf %110, %109 : vector<8x128xf32>
    %cst_15 = arith.constant 5.000000e-01 : f32
    %112 = vector.broadcast %cst_15 : f32 to vector<8x128xf32>
    %113 = arith.addf %111, %112 : vector<8x128xf32>
    %cst_16 = arith.constant 5.000000e-01 : f32
    %114 = vector.broadcast %cst_16 : f32 to vector<8x128xf32>
    %115 = arith.mulf %114, %92 : vector<8x128xf32>
    %116 = math.tanh %115 : vector<8x128xf32>
    %cst_17 = arith.constant 5.000000e-01 : f32
    %117 = vector.broadcast %cst_17 : f32 to vector<8x128xf32>
    %118 = arith.mulf %117, %116 : vector<8x128xf32>
    %cst_18 = arith.constant 5.000000e-01 : f32
    %119 = vector.broadcast %cst_18 : f32 to vector<8x128xf32>
    %120 = arith.addf %118, %119 : vector<8x128xf32>
    %c24_19 = arith.constant 24 : index
    %121 = memref.load %arg1[%c24_19] : memref<64xf32, #tpu.memory_space<smem>>
    %122 = vector.broadcast %121 : f32 to vector<8x128xf32>
    %123 = arith.mulf %99, %122 : vector<8x128xf32>
    %c25 = arith.constant 25 : index
    %124 = memref.load %arg1[%c25] : memref<64xf32, #tpu.memory_space<smem>>
    %125 = vector.broadcast %124 : f32 to vector<8x128xf32>
    %126 = arith.mulf %106, %125 : vector<8x128xf32>
    %127 = arith.addf %123, %126 : vector<8x128xf32>
    %c26 = arith.constant 26 : index
    %128 = memref.load %arg1[%c26] : memref<64xf32, #tpu.memory_space<smem>>
    %129 = vector.broadcast %128 : f32 to vector<8x128xf32>
    %130 = arith.mulf %113, %129 : vector<8x128xf32>
    %131 = arith.addf %127, %130 : vector<8x128xf32>
    %c27 = arith.constant 27 : index
    %132 = memref.load %arg1[%c27] : memref<64xf32, #tpu.memory_space<smem>>
    %133 = vector.broadcast %132 : f32 to vector<8x128xf32>
    %134 = arith.mulf %120, %133 : vector<8x128xf32>
    %135 = arith.addf %131, %134 : vector<8x128xf32>
    %c40 = arith.constant 40 : index
    %136 = memref.load %arg1[%c40] : memref<64xf32, #tpu.memory_space<smem>>
    %137 = vector.broadcast %136 : f32 to vector<8x128xf32>
    %138 = arith.addf %135, %137 : vector<8x128xf32>
    %c28 = arith.constant 28 : index
    %139 = memref.load %arg1[%c28] : memref<64xf32, #tpu.memory_space<smem>>
    %140 = vector.broadcast %139 : f32 to vector<8x128xf32>
    %141 = arith.mulf %99, %140 : vector<8x128xf32>
    %c29 = arith.constant 29 : index
    %142 = memref.load %arg1[%c29] : memref<64xf32, #tpu.memory_space<smem>>
    %143 = vector.broadcast %142 : f32 to vector<8x128xf32>
    %144 = arith.mulf %106, %143 : vector<8x128xf32>
    %145 = arith.addf %141, %144 : vector<8x128xf32>
    %c30 = arith.constant 30 : index
    %146 = memref.load %arg1[%c30] : memref<64xf32, #tpu.memory_space<smem>>
    %147 = vector.broadcast %146 : f32 to vector<8x128xf32>
    %148 = arith.mulf %113, %147 : vector<8x128xf32>
    %149 = arith.addf %145, %148 : vector<8x128xf32>
    %c31 = arith.constant 31 : index
    %150 = memref.load %arg1[%c31] : memref<64xf32, #tpu.memory_space<smem>>
    %151 = vector.broadcast %150 : f32 to vector<8x128xf32>
    %152 = arith.mulf %120, %151 : vector<8x128xf32>
    %153 = arith.addf %149, %152 : vector<8x128xf32>
    %c41 = arith.constant 41 : index
    %154 = memref.load %arg1[%c41] : memref<64xf32, #tpu.memory_space<smem>>
    %155 = vector.broadcast %154 : f32 to vector<8x128xf32>
    %156 = arith.addf %153, %155 : vector<8x128xf32>
    %c32_20 = arith.constant 32 : index
    %157 = memref.load %arg1[%c32_20] : memref<64xf32, #tpu.memory_space<smem>>
    %158 = vector.broadcast %157 : f32 to vector<8x128xf32>
    %159 = arith.mulf %99, %158 : vector<8x128xf32>
    %c33 = arith.constant 33 : index
    %160 = memref.load %arg1[%c33] : memref<64xf32, #tpu.memory_space<smem>>
    %161 = vector.broadcast %160 : f32 to vector<8x128xf32>
    %162 = arith.mulf %106, %161 : vector<8x128xf32>
    %163 = arith.addf %159, %162 : vector<8x128xf32>
    %c34 = arith.constant 34 : index
    %164 = memref.load %arg1[%c34] : memref<64xf32, #tpu.memory_space<smem>>
    %165 = vector.broadcast %164 : f32 to vector<8x128xf32>
    %166 = arith.mulf %113, %165 : vector<8x128xf32>
    %167 = arith.addf %163, %166 : vector<8x128xf32>
    %c35 = arith.constant 35 : index
    %168 = memref.load %arg1[%c35] : memref<64xf32, #tpu.memory_space<smem>>
    %169 = vector.broadcast %168 : f32 to vector<8x128xf32>
    %170 = arith.mulf %120, %169 : vector<8x128xf32>
    %171 = arith.addf %167, %170 : vector<8x128xf32>
    %c42 = arith.constant 42 : index
    %172 = memref.load %arg1[%c42] : memref<64xf32, #tpu.memory_space<smem>>
    %173 = vector.broadcast %172 : f32 to vector<8x128xf32>
    %174 = arith.addf %171, %173 : vector<8x128xf32>
    %c36 = arith.constant 36 : index
    %175 = memref.load %arg1[%c36] : memref<64xf32, #tpu.memory_space<smem>>
    %176 = vector.broadcast %175 : f32 to vector<8x128xf32>
    %177 = arith.mulf %99, %176 : vector<8x128xf32>
    %c37 = arith.constant 37 : index
    %178 = memref.load %arg1[%c37] : memref<64xf32, #tpu.memory_space<smem>>
    %179 = vector.broadcast %178 : f32 to vector<8x128xf32>
    %180 = arith.mulf %106, %179 : vector<8x128xf32>
    %181 = arith.addf %177, %180 : vector<8x128xf32>
    %c38 = arith.constant 38 : index
    %182 = memref.load %arg1[%c38] : memref<64xf32, #tpu.memory_space<smem>>
    %183 = vector.broadcast %182 : f32 to vector<8x128xf32>
    %184 = arith.mulf %113, %183 : vector<8x128xf32>
    %185 = arith.addf %181, %184 : vector<8x128xf32>
    %c39 = arith.constant 39 : index
    %186 = memref.load %arg1[%c39] : memref<64xf32, #tpu.memory_space<smem>>
    %187 = vector.broadcast %186 : f32 to vector<8x128xf32>
    %188 = arith.mulf %120, %187 : vector<8x128xf32>
    %189 = arith.addf %185, %188 : vector<8x128xf32>
    %c43 = arith.constant 43 : index
    %190 = memref.load %arg1[%c43] : memref<64xf32, #tpu.memory_space<smem>>
    %191 = vector.broadcast %190 : f32 to vector<8x128xf32>
    %192 = arith.addf %189, %191 : vector<8x128xf32>
    %cst_21 = arith.constant 5.000000e-01 : f32
    %193 = vector.broadcast %cst_21 : f32 to vector<8x128xf32>
    %194 = arith.mulf %193, %138 : vector<8x128xf32>
    %195 = math.tanh %194 : vector<8x128xf32>
    %cst_22 = arith.constant 5.000000e-01 : f32
    %196 = vector.broadcast %cst_22 : f32 to vector<8x128xf32>
    %197 = arith.mulf %196, %195 : vector<8x128xf32>
    %cst_23 = arith.constant 5.000000e-01 : f32
    %198 = vector.broadcast %cst_23 : f32 to vector<8x128xf32>
    %199 = arith.addf %197, %198 : vector<8x128xf32>
    %cst_24 = arith.constant 5.000000e-01 : f32
    %200 = vector.broadcast %cst_24 : f32 to vector<8x128xf32>
    %201 = arith.mulf %200, %156 : vector<8x128xf32>
    %202 = math.tanh %201 : vector<8x128xf32>
    %cst_25 = arith.constant 5.000000e-01 : f32
    %203 = vector.broadcast %cst_25 : f32 to vector<8x128xf32>
    %204 = arith.mulf %203, %202 : vector<8x128xf32>
    %cst_26 = arith.constant 5.000000e-01 : f32
    %205 = vector.broadcast %cst_26 : f32 to vector<8x128xf32>
    %206 = arith.addf %204, %205 : vector<8x128xf32>
    %cst_27 = arith.constant 5.000000e-01 : f32
    %207 = vector.broadcast %cst_27 : f32 to vector<8x128xf32>
    %208 = arith.mulf %207, %174 : vector<8x128xf32>
    %209 = math.tanh %208 : vector<8x128xf32>
    %cst_28 = arith.constant 5.000000e-01 : f32
    %210 = vector.broadcast %cst_28 : f32 to vector<8x128xf32>
    %211 = arith.mulf %210, %209 : vector<8x128xf32>
    %cst_29 = arith.constant 5.000000e-01 : f32
    %212 = vector.broadcast %cst_29 : f32 to vector<8x128xf32>
    %213 = arith.addf %211, %212 : vector<8x128xf32>
    %cst_30 = arith.constant 5.000000e-01 : f32
    %214 = vector.broadcast %cst_30 : f32 to vector<8x128xf32>
    %215 = arith.mulf %214, %192 : vector<8x128xf32>
    %216 = math.tanh %215 : vector<8x128xf32>
    %cst_31 = arith.constant 5.000000e-01 : f32
    %217 = vector.broadcast %cst_31 : f32 to vector<8x128xf32>
    %218 = arith.mulf %217, %216 : vector<8x128xf32>
    %cst_32 = arith.constant 5.000000e-01 : f32
    %219 = vector.broadcast %cst_32 : f32 to vector<8x128xf32>
    %220 = arith.addf %218, %219 : vector<8x128xf32>
    %c44 = arith.constant 44 : index
    %221 = memref.load %arg1[%c44] : memref<64xf32, #tpu.memory_space<smem>>
    %222 = vector.broadcast %221 : f32 to vector<8x128xf32>
    %223 = arith.mulf %199, %222 : vector<8x128xf32>
    %c45 = arith.constant 45 : index
    %224 = memref.load %arg1[%c45] : memref<64xf32, #tpu.memory_space<smem>>
    %225 = vector.broadcast %224 : f32 to vector<8x128xf32>
    %226 = arith.mulf %206, %225 : vector<8x128xf32>
    %227 = arith.addf %223, %226 : vector<8x128xf32>
    %c46 = arith.constant 46 : index
    %228 = memref.load %arg1[%c46] : memref<64xf32, #tpu.memory_space<smem>>
    %229 = vector.broadcast %228 : f32 to vector<8x128xf32>
    %230 = arith.mulf %213, %229 : vector<8x128xf32>
    %231 = arith.addf %227, %230 : vector<8x128xf32>
    %c47 = arith.constant 47 : index
    %232 = memref.load %arg1[%c47] : memref<64xf32, #tpu.memory_space<smem>>
    %233 = vector.broadcast %232 : f32 to vector<8x128xf32>
    %234 = arith.mulf %220, %233 : vector<8x128xf32>
    %235 = arith.addf %231, %234 : vector<8x128xf32>
    %c56 = arith.constant 56 : index
    %236 = memref.load %arg1[%c56] : memref<64xf32, #tpu.memory_space<smem>>
    %237 = vector.broadcast %236 : f32 to vector<8x128xf32>
    %238 = arith.addf %235, %237 : vector<8x128xf32>
    %c48 = arith.constant 48 : index
    %239 = memref.load %arg1[%c48] : memref<64xf32, #tpu.memory_space<smem>>
    %240 = vector.broadcast %239 : f32 to vector<8x128xf32>
    %241 = arith.mulf %199, %240 : vector<8x128xf32>
    %c49 = arith.constant 49 : index
    %242 = memref.load %arg1[%c49] : memref<64xf32, #tpu.memory_space<smem>>
    %243 = vector.broadcast %242 : f32 to vector<8x128xf32>
    %244 = arith.mulf %206, %243 : vector<8x128xf32>
    %245 = arith.addf %241, %244 : vector<8x128xf32>
    %c50 = arith.constant 50 : index
    %246 = memref.load %arg1[%c50] : memref<64xf32, #tpu.memory_space<smem>>
    %247 = vector.broadcast %246 : f32 to vector<8x128xf32>
    %248 = arith.mulf %213, %247 : vector<8x128xf32>
    %249 = arith.addf %245, %248 : vector<8x128xf32>
    %c51 = arith.constant 51 : index
    %250 = memref.load %arg1[%c51] : memref<64xf32, #tpu.memory_space<smem>>
    %251 = vector.broadcast %250 : f32 to vector<8x128xf32>
    %252 = arith.mulf %220, %251 : vector<8x128xf32>
    %253 = arith.addf %249, %252 : vector<8x128xf32>
    %c57 = arith.constant 57 : index
    %254 = memref.load %arg1[%c57] : memref<64xf32, #tpu.memory_space<smem>>
    %255 = vector.broadcast %254 : f32 to vector<8x128xf32>
    %256 = arith.addf %253, %255 : vector<8x128xf32>
    %c52 = arith.constant 52 : index
    %257 = memref.load %arg1[%c52] : memref<64xf32, #tpu.memory_space<smem>>
    %258 = vector.broadcast %257 : f32 to vector<8x128xf32>
    %259 = arith.mulf %199, %258 : vector<8x128xf32>
    %c53 = arith.constant 53 : index
    %260 = memref.load %arg1[%c53] : memref<64xf32, #tpu.memory_space<smem>>
    %261 = vector.broadcast %260 : f32 to vector<8x128xf32>
    %262 = arith.mulf %206, %261 : vector<8x128xf32>
    %263 = arith.addf %259, %262 : vector<8x128xf32>
    %c54 = arith.constant 54 : index
    %264 = memref.load %arg1[%c54] : memref<64xf32, #tpu.memory_space<smem>>
    %265 = vector.broadcast %264 : f32 to vector<8x128xf32>
    %266 = arith.mulf %213, %265 : vector<8x128xf32>
    %267 = arith.addf %263, %266 : vector<8x128xf32>
    %c55 = arith.constant 55 : index
    %268 = memref.load %arg1[%c55] : memref<64xf32, #tpu.memory_space<smem>>
    %269 = vector.broadcast %268 : f32 to vector<8x128xf32>
    %270 = arith.mulf %220, %269 : vector<8x128xf32>
    %271 = arith.addf %267, %270 : vector<8x128xf32>
    %c58 = arith.constant 58 : index
    %272 = memref.load %arg1[%c58] : memref<64xf32, #tpu.memory_space<smem>>
    %273 = vector.broadcast %272 : f32 to vector<8x128xf32>
    %274 = arith.addf %271, %273 : vector<8x128xf32>
    %275 = arith.maximumf %238, %256 : vector<8x128xf32>
    %276 = arith.maximumf %275, %274 : vector<8x128xf32>
    %277 = arith.subf %238, %276 : vector<8x128xf32>
    %278 = math.exp %277 : vector<8x128xf32>
    %279 = arith.subf %256, %276 : vector<8x128xf32>
    %280 = math.exp %279 : vector<8x128xf32>
    %281 = arith.subf %274, %276 : vector<8x128xf32>
    %282 = math.exp %281 : vector<8x128xf32>
    %283 = arith.addf %278, %280 : vector<8x128xf32>
    %284 = arith.addf %283, %282 : vector<8x128xf32>
    %285 = tpu.reciprocal %284 {approx = true} : vector<8x128xf32> -> vector<8x128xf32>
    %286 = arith.mulf %284, %285 : vector<8x128xf32>
    %cst_33 = arith.constant 2.000000e+00 : f32
    %287 = vector.broadcast %cst_33 : f32 to vector<8x128xf32>
    %288 = arith.subf %287, %286 : vector<8x128xf32>
    %289 = arith.mulf %285, %288 : vector<8x128xf32>
    %290 = arith.mulf %278, %289 : vector<8x128xf32>
    %c0_34 = arith.constant 0 : index
    %c0_35 = arith.constant 0 : index
    %291 = vector.load %arg3[%c0_34, %c0_35] : memref<24x128xf32, #tpu.memory_space<vmem>>, vector<8x128xf32>
    tpu.vector_store %arg3[%c0_34, %c0_35], %290 {strides = array<i32>} : memref<24x128xf32, #tpu.memory_space<vmem>>, vector<8x128xf32>,
    %292 = arith.mulf %280, %289 : vector<8x128xf32>
    %c8_36 = arith.constant 8 : index
    %c0_37 = arith.constant 0 : index
    %293 = vector.load %arg3[%c8_36, %c0_37] : memref<24x128xf32, #tpu.memory_space<vmem>>, vector<8x128xf32>
    tpu.vector_store %arg3[%c8_36, %c0_37], %292 {strides = array<i32>} : memref<24x128xf32, #tpu.memory_space<vmem>>, vector<8x128xf32>,
    %294 = arith.mulf %282, %289 : vector<8x128xf32>
    %c16_38 = arith.constant 16 : index
    %c0_39 = arith.constant 0 : index
    %295 = vector.load %arg3[%c16_38, %c0_39] : memref<24x128xf32, #tpu.memory_space<vmem>>, vector<8x128xf32>
    tpu.vector_store %arg3[%c16_38, %c0_39], %294 {strides = array<i32>} : memref<24x128xf32, #tpu.memory_space<vmem>>, vector<8x128xf32>,
    return
  }
  func.func @transform_0(%arg0: i32) -> i32 {
    %c0_i32 = arith.constant 0 : i32
    %c0_i32_0 = arith.constant 0 : i32
    return %c0_i32 : i32
  }
  func.func @transform_1(%arg0: i32) -> (i32, i32) {
    %c0_i32 = arith.constant 0 : i32
    %c0_i32_0 = arith.constant 0 : i32
    return %c0_i32, %arg0 : i32, i32
  }
  func.func @transform_2(%arg0: i32) -> (i32, i32) {
    %c0_i32 = arith.constant 0 : i32
    %c0_i32_0 = arith.constant 0 : i32
    return %c0_i32, %arg0 : i32, i32
  }
}

</mosaic_0001>

<llo_original>
// kernel: pallas_mlp.1
$region0: #{pallas_mlp.1}
  #allocation0 [shape = 'u32[]', space=smem, size = 0x4, offset = 0x4, fixed_abs, tag = 'smem constant byte address 0x4 - core index']
  #allocation1 [shape = 'u32[144,128]{1,0:T(1,128)}', space=vmem, size = 0x12000, scoped, tag = 'internal scratch']
  %s0 = inlined_call_operand.vmem [shape: f32[64], index: 0, kind: input, shape index: {}]
  %s1 = inlined_call_operand.vmem [shape: f32[40,128], index: 1, kind: input, shape index: {}]
  %s2 = inlined_call_operand.vmem [shape: f32[24,128], index: 2, kind: output, shape index: {}]
  %s3 = sld [smem:[#allocation0]]
  $region22: #{pallas_mlp.1} parent=0
    _
  %s5 = ssub.s32 1, %s3
  %s6 = scalar_select 0, %s5, %s3
  $region1: #{pallas_mlp.1} parent=0
    #allocation2 [shape = 'u8[512]{0}', space=smem, size = 0x200, scoped, tag = 'input window, operand 0, single buffered']
    #allocation3 [shape = 's32[1]{0}', space=sflag, size = 0x4, scoped, tag = 'scoped memory for pallas_mlp.1']
    %7 = vsyncpa [#allocation3], 0
    // Predicated region
    $region2: #{pallas_mlp.1} parent=1 // pred_check
      _
    $region3: #{pallas_mlp.1} parent=1 // pred_check_branch
      %9 = sbr.rel (0) target = $region5
    $region4: #{pallas_mlp.1} parent=1 // pred_region
      %s11 = ssub.s32 16, 16
      %12 = vsyncadd [#allocation3], %s11
      %s14 = sshll.u32 %s0, 4
      %s15 = int_to_ptr.vmem [resolvable:$true] %s14
      %17 = dma.vmem_to_smem %s15, 16, [#allocation2], [#allocation3]
    $region5: #{pallas_mlp.1} parent=1 // pred_fallthru
      _
    // Predicated region
    $region6: #{pallas_mlp.1} parent=1 // pred_check
      _
    $region7: #{pallas_mlp.1} parent=1 // pred_check_branch
      %19 = sbr.rel (0) target = $region9
    $region8: #{pallas_mlp.1} parent=1 // pred_region
      _
    $region9: #{pallas_mlp.1} parent=1 // pred_fallthru
      _
    // Predicated region
    $region10: #{pallas_mlp.1} parent=1 // pred_check
      _
    $region11: #{pallas_mlp.1} parent=1 // pred_check_branch
      %21 = sbr.rel (0) target = $region13
    $region12: #{pallas_mlp.1} parent=1 // pred_region
      %22 = dma.done [#allocation3], 16
    $region13: #{pallas_mlp.1} parent=1 // pred_fallthru
      _
    %23 = sfence
    %v24 = vld [vmem:[%s1] sm:$0xff]
    %v25 = vld [vmem:[%s1 + $0x8] sm:$0xff]
    %v26 = vld [vmem:[%s1 + $0x10] sm:$0xff]
    %v27 = vld [vmem:[%s1 + $0x18] sm:$0xff]
    %v28 = vld [vmem:[%s1 + $0x20] sm:$0xff]
    %s29 = sld [smem:[#allocation2]]
    %v30 = vstv %s29
    %v31 = vmul.f32 %v24, %v30
    %s32 = sld [smem:[#allocation2 + $0x1]]
    %v33 = vstv %s32
    %v34 = vmul.f32 %v25, %v33
    %v35 = vadd.f32 %v31, %v34
    %s36 = sld [smem:[#allocation2 + $0x2]]
    %v37 = vstv %s36
    %v38 = vmul.f32 %v26, %v37
    %v39 = vadd.f32 %v35, %v38
    %s40 = sld [smem:[#allocation2 + $0x3]]
    %v41 = vstv %s40
    %v42 = vmul.f32 %v27, %v41
    %v43 = vadd.f32 %v39, %v42
    %s44 = sld [smem:[#allocation2 + $0x4]]
    %v45 = vstv %s44
    %v46 = vmul.f32 %v28, %v45
    %v47 = vadd.f32 %v43, %v46
    %s48 = sld [smem:[#allocation2 + $0x14]]
    %v49 = vstv %s48
    %v50 = vadd.f32 %v47, %v49
    %s51 = sld [smem:[#allocation2 + $0x5]]
    %v52 = vstv %s51
    %v53 = vmul.f32 %v24, %v52
    %s54 = sld [smem:[#allocation2 + $0x6]]
    %v55 = vstv %s54
    %v56 = vmul.f32 %v25, %v55
    %v57 = vadd.f32 %v53, %v56
    %s58 = sld [smem:[#allocation2 + $0x7]]
    %v59 = vstv %s58
    %v60 = vmul.f32 %v26, %v59
    %v61 = vadd.f32 %v57, %v60
    %s62 = sld [smem:[#allocation2 + $0x8]]
    %v63 = vstv %s62
    %v64 = vmul.f32 %v27, %v63
    %v65 = vadd.f32 %v61, %v64
    %s66 = sld [smem:[#allocation2 + $0x9]]
    %v67 = vstv %s66
    %v68 = vmul.f32 %v28, %v67
    %v69 = vadd.f32 %v65, %v68
    %s70 = sld [smem:[#allocation2 + $0x15]]
    %v71 = vstv %s70
    %v72 = vadd.f32 %v69, %v71
    %s73 = sld [smem:[#allocation2 + $0xa]]
    %v74 = vstv %s73
    %v75 = vmul.f32 %v24, %v74
    %s76 = sld [smem:[#allocation2 + $0xb]]
    %v77 = vstv %s76
    %v78 = vmul.f32 %v25, %v77
    %v79 = vadd.f32 %v75, %v78
    %s80 = sld [smem:[#allocation2 + $0xc]]
    %v81 = vstv %s80
    %v82 = vmul.f32 %v26, %v81
    %v83 = vadd.f32 %v79, %v82
    %s84 = sld [smem:[#allocation2 + $0xd]]
    %v85 = vstv %s84
    %v86 = vmul.f32 %v27, %v85
    %v87 = vadd.f32 %v83, %v86
    %s88 = sld [smem:[#allocation2 + $0xe]]
    %v89 = vstv %s88
    %v90 = vmul.f32 %v28, %v89
    %v91 = vadd.f32 %v87, %v90
    %s92 = sld [smem:[#allocation2 + $0x16]]
    %v93 = vstv %s92
    %v94 = vadd.f32 %v91, %v93
    %s95 = sld [smem:[#allocation2 + $0xf]]
    %v96 = vstv %s95
    %v97 = vmul.f32 %v24, %v96
    %s98 = sld [smem:[#allocation2 + $0x10]]
    %v99 = vstv %s98
    %v100 = vmul.f32 %v25, %v99
    %v101 = vadd.f32 %v97, %v100
    %s102 = sld [smem:[#allocation2 + $0x11]]
    %v103 = vstv %s102
    %v104 = vmul.f32 %v26, %v103
    %v105 = vadd.f32 %v101, %v104
    %s106 = sld [smem:[#allocation2 + $0x12]]
    %v107 = vstv %s106
    %v108 = vmul.f32 %v27, %v107
    %v109 = vadd.f32 %v105, %v108
    %s110 = sld [smem:[#allocation2 + $0x13]]
    %v111 = vstv %s110
    %v112 = vmul.f32 %v28, %v111
    %v113 = vadd.f32 %v109, %v112
    %s114 = sld [smem:[#allocation2 + $0x17]]
    %v115 = vstv %s114
    %v116 = vadd.f32 %v113, %v115
    %v117 = vmul.f32 %v50, 0.5
    %v118 = vtanh.pop %v117
    %v119 = vmul.f32 %v118, 0.5
    %v120 = vadd.f32 %v119, 0.5
    %v121 = vmul.f32 %v72, 0.5
    %v122 = vtanh.pop %v121
    %v123 = vmul.f32 %v122, 0.5
    %v124 = vadd.f32 %v123, 0.5
    %v125 = vmul.f32 %v94, 0.5
    %v126 = vtanh.pop %v125
    %v127 = vmul.f32 %v126, 0.5
    %v128 = vadd.f32 %v127, 0.5
    %v129 = vmul.f32 %v116, 0.5
    %v130 = vtanh.pop %v129
    %v131 = vmul.f32 %v130, 0.5
    %v132 = vadd.f32 %v131, 0.5
    %s133 = sld [smem:[#allocation2 + $0x18]]
    %v134 = vstv %s133
    %v135 = vmul.f32 %v120, %v134
    %s136 = sld [smem:[#allocation2 + $0x19]]
    %v137 = vstv %s136
    %v138 = vmul.f32 %v124, %v137
    %v139 = vadd.f32 %v135, %v138
    %s140 = sld [smem:[#allocation2 + $0x1a]]
    %v141 = vstv %s140
    %v142 = vmul.f32 %v128, %v141
    %v143 = vadd.f32 %v139, %v142
    %s144 = sld [smem:[#allocation2 + $0x1b]]
    %v145 = vstv %s144
    %v146 = vmul.f32 %v132, %v145
    %v147 = vadd.f32 %v143, %v146
    %s148 = sld [smem:[#allocation2 + $0x28]]
    %v149 = vstv %s148
    %v150 = vadd.f32 %v147, %v149
    %s151 = sld [smem:[#allocation2 + $0x1c]]
    %v152 = vstv %s151
    %v153 = vmul.f32 %v120, %v152
    %s154 = sld [smem:[#allocation2 + $0x1d]]
    %v155 = vstv %s154
    %v156 = vmul.f32 %v124, %v155
    %v157 = vadd.f32 %v153, %v156
    %s158 = sld [smem:[#allocation2 + $0x1e]]
    %v159 = vstv %s158
    %v160 = vmul.f32 %v128, %v159
    %v161 = vadd.f32 %v157, %v160
    %s162 = sld [smem:[#allocation2 + $0x1f]]
    %v163 = vstv %s162
    %v164 = vmul.f32 %v132, %v163
    %v165 = vadd.f32 %v161, %v164
    %s166 = sld [smem:[#allocation2 + $0x29]]
    %v167 = vstv %s166
    %v168 = vadd.f32 %v165, %v167
    %s169 = sld [smem:[#allocation2 + $0x20]]
    %v170 = vstv %s169
    %v171 = vmul.f32 %v120, %v170
    %s172 = sld [smem:[#allocation2 + $0x21]]
    %v173 = vstv %s172
    %v174 = vmul.f32 %v124, %v173
    %v175 = vadd.f32 %v171, %v174
    %s176 = sld [smem:[#allocation2 + $0x22]]
    %v177 = vstv %s176
    %v178 = vmul.f32 %v128, %v177
    %v179 = vadd.f32 %v175, %v178
    %s180 = sld [smem:[#allocation2 + $0x23]]
    %v181 = vstv %s180
    %v182 = vmul.f32 %v132, %v181
    %v183 = vadd.f32 %v179, %v182
    %s184 = sld [smem:[#allocation2 + $0x2a]]
    %v185 = vstv %s184
    %v186 = vadd.f32 %v183, %v185
    %s187 = sld [smem:[#allocation2 + $0x24]]
    %v188 = vstv %s187
    %v189 = vmul.f32 %v120, %v188
    %s190 = sld [smem:[#allocation2 + $0x25]]
    %v191 = vstv %s190
    %v192 = vmul.f32 %v124, %v191
    %v193 = vadd.f32 %v189, %v192
    %s194 = sld [smem:[#allocation2 + $0x26]]
    %v195 = vstv %s194
    %v196 = vmul.f32 %v128, %v195
    %v197 = vadd.f32 %v193, %v196
    %s198 = sld [smem:[#allocation2 + $0x27]]
    %v199 = vstv %s198
    %v200 = vmul.f32 %v132, %v199
    %v201 = vadd.f32 %v197, %v200
    %s202 = sld [smem:[#allocation2 + $0x2b]]
    %v203 = vstv %s202
    %v204 = vadd.f32 %v201, %v203
    %v205 = vmul.f32 %v150, 0.5
    %v206 = vtanh.pop %v205
    %v207 = vmul.f32 %v206, 0.5
    %v208 = vadd.f32 %v207, 0.5
    %v209 = vmul.f32 %v168, 0.5
    %v210 = vtanh.pop %v209
    %v211 = vmul.f32 %v210, 0.5
    %v212 = vadd.f32 %v211, 0.5
    %v213 = vmul.f32 %v186, 0.5
    %v214 = vtanh.pop %v213
    %v215 = vmul.f32 %v214, 0.5
    %v216 = vadd.f32 %v215, 0.5
    %v217 = vmul.f32 %v204, 0.5
    %v218 = vtanh.pop %v217
    %v219 = vmul.f32 %v218, 0.5
    %v220 = vadd.f32 %v219, 0.5
    %s221 = sld [smem:[#allocation2 + $0x2c]]
    %v222 = vstv %s221
    %v223 = vmul.f32 %v208, %v222
    %s224 = sld [smem:[#allocation2 + $0x2d]]
    %v225 = vstv %s224
    %v226 = vmul.f32 %v212, %v225
    %v227 = vadd.f32 %v223, %v226
    %s228 = sld [smem:[#allocation2 + $0x2e]]
    %v229 = vstv %s228
    %v230 = vmul.f32 %v216, %v229
    %v231 = vadd.f32 %v227, %v230
    %s232 = sld [smem:[#allocation2 + $0x2f]]
    %v233 = vstv %s232
    %v234 = vmul.f32 %v220, %v233
    %v235 = vadd.f32 %v231, %v234
    %s236 = sld [smem:[#allocation2 + $0x38]]
    %v237 = vstv %s236
    %v238 = vadd.f32 %v235, %v237
    %s239 = sld [smem:[#allocation2 + $0x30]]
    %v240 = vstv %s239
    %v241 = vmul.f32 %v208, %v240
    %s242 = sld [smem:[#allocation2 + $0x31]]
    %v243 = vstv %s242
    %v244 = vmul.f32 %v212, %v243
    %v245 = vadd.f32 %v241, %v244
    %s246 = sld [smem:[#allocation2 + $0x32]]
    %v247 = vstv %s246
    %v248 = vmul.f32 %v216, %v247
    %v249 = vadd.f32 %v245, %v248
    %s250 = sld [smem:[#allocation2 + $0x33]]
    %v251 = vstv %s250
    %v252 = vmul.f32 %v220, %v251
    %v253 = vadd.f32 %v249, %v252
    %s254 = sld [smem:[#allocation2 + $0x39]]
    %v255 = vstv %s254
    %v256 = vadd.f32 %v253, %v255
    %s257 = sld [smem:[#allocation2 + $0x34]]
    %v258 = vstv %s257
    %v259 = vmul.f32 %v208, %v258
    %s260 = sld [smem:[#allocation2 + $0x35]]
    %v261 = vstv %s260
    %v262 = vmul.f32 %v212, %v261
    %v263 = vadd.f32 %v259, %v262
    %s264 = sld [smem:[#allocation2 + $0x36]]
    %v265 = vstv %s264
    %v266 = vmul.f32 %v216, %v265
    %v267 = vadd.f32 %v263, %v266
    %s268 = sld [smem:[#allocation2 + $0x37]]
    %v269 = vstv %s268
    %v270 = vmul.f32 %v220, %v269
    %v271 = vadd.f32 %v267, %v270
    %s272 = sld [smem:[#allocation2 + $0x3a]]
    %v273 = vstv %s272
    %v274 = vadd.f32 %v271, %v273
    %v275 = vmax.f32 %v238, %v256
    %v276 = vmax.f32 %v275, %v274
    %v277 = vsub.f32 %v238, %v276
    %v278 = vmul.f32 %v277, 1.442695
    %v279 = vpow.pop %v278
    %v280 = vsub.f32 %v256, %v276
    %v281 = vmul.f32 %v280, 1.442695
    %v282 = vpow.pop %v281
    %v283 = vsub.f32 %v274, %v276
    %v284 = vmul.f32 %v283, 1.442695
    %v285 = vpow.pop %v284
    %v286 = vadd.f32 %v279, %v282
    %v287 = vadd.f32 %v286, %v285
    %v288 = vrcp.pop %v287
    %v289 = vmul.f32 %v287, %v288
    %v290 = vsub.f32 2.0, %v289
    %v291 = vmul.f32 %v288, %v290
    %v292 = vmul.f32 %v279, %v291
    %293 = vst [vmem:[%s2] sm:$0xff] %v292
    %v294 = vmul.f32 %v282, %v291
    %295 = vst [vmem:[%s2 + $0x8] sm:$0xff] %v294
    %v296 = vmul.f32 %v285, %v291
    %297 = vst [vmem:[%s2 + $0x10] sm:$0xff] %v296
    // Predicated region
    $region14: #{pallas_mlp.1} parent=1 // pred_check
      _
    $region15: #{pallas_mlp.1} parent=1 // pred_check_branch
      %299 = sbr.rel (0) target = $region17
    $region16: #{pallas_mlp.1} parent=1 // pred_region
      _
    $region17: #{pallas_mlp.1} parent=1 // pred_fallthru
      _
    // Predicated region
    $region18: #{pallas_mlp.1} parent=1 // pred_check
      _
    $region19: #{pallas_mlp.1} parent=1 // pred_check_branch
      %301 = sbr.rel (0) target = $region21
    $region20: #{pallas_mlp.1} parent=1 // pred_region
      _
    $region21: #{pallas_mlp.1} parent=1 // pred_fallthru
      _
    %302 = vsyncpa [#allocation3], 1

</llo_original>
